<compile_context>
chip_gen: v5e
topology: v5e:2x2
jax: 0.10.0
libtpu: 0.0.40
codegen_flags: <defaults>
</compile_context>

<pallas_src>
import jax
import jax.numpy as jnp
from jax.experimental import pallas as pl
from jax.experimental.pallas import tpu as pltpu


def _round_up(x, m):
    return (x + m - 1) // m * m


# -----------------------------------------------------------------------------
# Kernel: one (i, j, k) grid step of  out = tanh(adj @ (x @ w + b))
# -----------------------------------------------------------------------------
def gcn_kernel(adj_ref, x_ref, w_ref, b_ref, out_ref, acc_ref):
    # adj_ref: (tm, tk)    row-tile i, contraction-tile k of the adjacency
    # x_ref:   (tk, F_in)  node features for contraction-tile k (full feature dim)
    # w_ref:   (F_in, tn)  weight column tile j
    # b_ref:   (1, tn)     bias column tile j
    # out_ref: (tm, tn)    output tile (resident across the k axis)
    # acc_ref: (tm, tn)    f32 VMEM accumulator scratch
    k = pl.program_id(2)

    @pl.when(k == 0)
    def _():
        acc_ref[...] = jnp.zeros_like(acc_ref)

    # support = x @ w + b for this tile of nodes; stays in VMEM / vregs.
    support = jnp.dot(x_ref[...], w_ref[...], preferred_element_type=jnp.float32)
    support = support + b_ref[...]

    # Accumulate adj-tile @ support-tile over the node contraction axis.
    acc_ref[...] += jnp.dot(adj_ref[...], support, preferred_element_type=jnp.float32)

    @pl.when(k == pl.num_programs(2) - 1)
    def _():
        out_ref[...] = jnp.tanh(acc_ref[...]).astype(out_ref.dtype)


# -----------------------------------------------------------------------------
# Wrapper: padding / layout glue + pallas_call
# -----------------------------------------------------------------------------
def graph_convolution(x, adj, weight, bias, *, tm=128, tn=128, tk=128):
    """tanh(adj @ (x @ weight.T + bias)) via a fused Pallas TPU kernel.

    x:      (N, F_in)         node features
    adj:    (N, N)            dense adjacency
    weight: (F_out, F_in)     PyTorch nn.Linear weight layout
    bias:   (F_out,)          PyTorch nn.Linear bias
    returns (N, F_out)
    """
    N, F_in = x.shape
    F_out = weight.shape[0]

    # Pad so tiles divide evenly and the output store is lane-dense.
    n_pad = _round_up(N, max(tm, tk))
    f_out_pad = _round_up(F_out, tn)

    x_p = jnp.zeros((n_pad, F_in), jnp.float32).at[:N, :].set(x.astype(jnp.float32))
    adj_p = jnp.zeros((n_pad, n_pad), jnp.float32).at[:N, :N].set(adj.astype(jnp.float32))
    w_p = jnp.zeros((F_in, f_out_pad), jnp.float32).at[:, :F_out].set(
        weight.astype(jnp.float32).T)
    b_p = jnp.zeros((1, f_out_pad), jnp.float32).at[:, :F_out].set(
        bias.astype(jnp.float32)[None, :])

    grid = (n_pad // tm, f_out_pad // tn, n_pad // tk)

    out_p = pl.pallas_call(
        gcn_kernel,
        out_shape=jax.ShapeDtypeStruct((n_pad, f_out_pad), jnp.float32),
        grid_spec=pltpu.PrefetchScalarGridSpec(
            num_scalar_prefetch=0,
            grid=grid,
            in_specs=[
                pl.BlockSpec((tm, tk), lambda i, j, k: (i, k)),    # adj tile
                pl.BlockSpec((tk, F_in), lambda i, j, k: (k, 0)),  # x tile (full F_in)
                pl.BlockSpec((F_in, tn), lambda i, j, k: (0, j)),  # weight col tile
                pl.BlockSpec((1, tn), lambda i, j, k: (0, j)),     # bias col tile
            ],
            out_specs=pl.BlockSpec((tm, tn), lambda i, j, k: (i, j)),
            scratch_shapes=[pltpu.VMEM((tm, tn), jnp.float32)],
        ),
        compiler_params=pltpu.CompilerParams(
            dimension_semantics=("parallel", "parallel", "arbitrary")),
    )(adj_p, x_p, w_p, b_p)

    return out_p[:N, :F_out]


# -----------------------------------------------------------------------------
if __name__ == "__main__":
    # Small shapes consistent with the module: 16 nodes, 32 -> 32 features.
    N, F_in, F_out = 16, 32, 32

    key = jax.random.PRNGKey(0)
    kx, ka, kw, kb = jax.random.split(key, 4)

    x = jax.random.normal(kx, (N, F_in), dtype=jnp.float32)
    adj = (jax.random.uniform(ka, (N, N)) < 0.3).astype(jnp.float32)

    # Deterministic synthetic nn.Linear parameters (PyTorch-style uniform init range).
    bound = 1.0 / (F_in ** 0.5)
    weight = jax.random.uniform(kw, (F_out, F_in), minval=-bound, maxval=bound,
                                dtype=jnp.float32)
    bias = jax.random.uniform(kb, (F_out,), minval=-bound, maxval=bound,
                              dtype=jnp.float32)

    out = graph_convolution(x, adj, weight, bias)
    out = jax.block_until_ready(out)

    # Reference check (plain XLA).
    ref = jnp.tanh(adj @ (x @ weight.T + bias))
    assert out.shape == (N, F_out)
    assert jnp.allclose(out, ref, atol=1e-5, rtol=1e-5)
    print("KERNEL_OK")
</pallas_src>

<mosaic_0001>
module attributes {stable_mosaic.version = 11 : i64} {
  func.func @gcn_kernel(%arg0: i32, %arg1: i32, %arg2: i32, %arg3: memref<128x128xf32, #tpu.memory_space<vmem>>, %arg4: memref<128x32xf32, #tpu.memory_space<vmem>>, %arg5: memref<32x128xf32, #tpu.memory_space<vmem>>, %arg6: memref<1x128xf32, #tpu.memory_space<vmem>>, %arg7: memref<128x128xf32, #tpu.memory_space<vmem>>, %arg8: memref<128x128xf32, #tpu.memory_space<vmem>>) attributes {dimension_semantics = [#tpu.dimension_semantics<parallel>, #tpu.dimension_semantics<parallel>, #tpu.dimension_semantics<arbitrary>], iteration_bounds = array<i64: 1, 1, 1>, scalar_prefetch = 0 : i64, scratch_operands = 1 : i64, tpu.core_type = #tpu.core_type<tc>, window_params = [{transform_indices = @transform_0, window_bounds = array<i64: 128, 128>}, {transform_indices = @transform_1, window_bounds = array<i64: 128, 32>}, {transform_indices = @transform_2, window_bounds = array<i64: 32, 128>}, {transform_indices = @transform_3, window_bounds = array<i64: 1, 128>}, {transform_indices = @transform_4, window_bounds = array<i64: 128, 128>}]} {
    %c0_i32 = arith.constant 0 : i32
    %0 = arith.cmpi eq, %arg2, %c0_i32 : i32
    %1 = arith.extui %0 : i1 to i32
    %c0_i32_0 = arith.constant 0 : i32
    %2 = arith.cmpi ne, %1, %c0_i32_0 : i32
    scf.if %2 {
      %cst_15 = arith.constant 0.000000e+00 : f32
      %17 = vector.broadcast %cst_15 : f32 to vector<128x128xf32>
      %c0_16 = arith.constant 0 : index
      %c0_17 = arith.constant 0 : index
      %18 = vector.load %arg8[%c0_16, %c0_17] : memref<128x128xf32, #tpu.memory_space<vmem>>, vector<128x128xf32>
      tpu.vector_store %arg8[%c0_16, %c0_17], %17 {strides = array<i32>} : memref<128x128xf32, #tpu.memory_space<vmem>>, vector<128x128xf32>,
    } else {
    }
    %c0 = arith.constant 0 : index
    %c0_1 = arith.constant 0 : index
    %3 = vector.load %arg4[%c0, %c0_1] : memref<128x32xf32, #tpu.memory_space<vmem>>, vector<128x32xf32>
    %c0_2 = arith.constant 0 : index
    %c0_3 = arith.constant 0 : index
    %4 = vector.load %arg5[%c0_2, %c0_3] : memref<32x128xf32, #tpu.memory_space<vmem>>, vector<32x128xf32>
    %cst = arith.constant dense<0.000000e+00> : vector<128x128xf32>
    %5 = tpu.matmul %3, %4, %cst {dimension_numbers = #tpu.dot_dimension_numbers<[1], [0], [0], [1], [0, 0, 1, 1], [], []>} : vector<128x32xf32>, vector<32x128xf32>, vector<128x128xf32> -> vector<128x128xf32>
    %c0_4 = arith.constant 0 : index
    %c0_5 = arith.constant 0 : index
    %6 = vector.load %arg6[%c0_4, %c0_5] : memref<1x128xf32, #tpu.memory_space<vmem>>, vector<1x128xf32>
    %7 = vector.broadcast %6 : vector<1x128xf32> to vector<128x128xf32>
    %8 = arith.addf %5, %7 : vector<128x128xf32>
    %c0_6 = arith.constant 0 : index
    %c0_7 = arith.constant 0 : index
    %9 = vector.load %arg8[%c0_6, %c0_7] : memref<128x128xf32, #tpu.memory_space<vmem>>, vector<128x128xf32>
    %c0_8 = arith.constant 0 : index
    %c0_9 = arith.constant 0 : index
    %10 = vector.load %arg3[%c0_8, %c0_9] : memref<128x128xf32, #tpu.memory_space<vmem>>, vector<128x128xf32>
    %cst_10 = arith.constant dense<0.000000e+00> : vector<128x128xf32>
    %11 = tpu.matmul %10, %8, %cst_10 {dimension_numbers = #tpu.dot_dimension_numbers<[1], [0], [0], [1], [0, 0, 1, 1], [], []>} : vector<128x128xf32>, vector<128x128xf32>, vector<128x128xf32> -> vector<128x128xf32>
    %12 = arith.addf %9, %11 : vector<128x128xf32>
    %c0_11 = arith.constant 0 : index
    %c0_12 = arith.constant 0 : index
    %13 = vector.load %arg8[%c0_11, %c0_12] : memref<128x128xf32, #tpu.memory_space<vmem>>, vector<128x128xf32>
    tpu.vector_store %arg8[%c0_11, %c0_12], %12 {strides = array<i32>} : memref<128x128xf32, #tpu.memory_space<vmem>>, vector<128x128xf32>,
    %c0_i32_13 = arith.constant 0 : i32
    %14 = arith.cmpi eq, %arg2, %c0_i32_13 : i32
    %15 = arith.extui %14 : i1 to i32
    %c0_i32_14 = arith.constant 0 : i32
    %16 = arith.cmpi ne, %15, %c0_i32_14 : i32
    scf.if %16 {
      %c0_15 = arith.constant 0 : index
      %c0_16 = arith.constant 0 : index
      %17 = vector.load %arg8[%c0_15, %c0_16] : memref<128x128xf32, #tpu.memory_space<vmem>>, vector<128x128xf32>
      %18 = math.tanh %17 : vector<128x128xf32>
      %c0_17 = arith.constant 0 : index
      %c0_18 = arith.constant 0 : index
      %19 = vector.load %arg7[%c0_17, %c0_18] : memref<128x128xf32, #tpu.memory_space<vmem>>, vector<128x128xf32>
      tpu.vector_store %arg7[%c0_17, %c0_18], %18 {strides = array<i32>} : memref<128x128xf32, #tpu.memory_space<vmem>>, vector<128x128xf32>,
    } else {
    }
    return
  }
  func.func @transform_0(%arg0: i32, %arg1: i32, %arg2: i32) -> (i32, i32) {
    %c0_i32 = arith.constant 0 : i32
    return %arg0, %arg2 : i32, i32
  }
  func.func @transform_1(%arg0: i32, %arg1: i32, %arg2: i32) -> (i32, i32) {
    %c0_i32 = arith.constant 0 : i32
    %c0_i32_0 = arith.constant 0 : i32
    return %arg2, %c0_i32 : i32, i32
  }
  func.func @transform_2(%arg0: i32, %arg1: i32, %arg2: i32) -> (i32, i32) {
    %c0_i32 = arith.constant 0 : i32
    %c0_i32_0 = arith.constant 0 : i32
    return %c0_i32, %arg1 : i32, i32
  }
  func.func @transform_3(%arg0: i32, %arg1: i32, %arg2: i32) -> (i32, i32) {
    %c0_i32 = arith.constant 0 : i32
    %c0_i32_0 = arith.constant 0 : i32
    return %c0_i32, %arg1 : i32, i32
  }
  func.func @transform_4(%arg0: i32, %arg1: i32, %arg2: i32) -> (i32, i32) {
    %c0_i32 = arith.constant 0 : i32
    return %arg0, %arg1 : i32, i32
  }
}

</mosaic_0001>

<llo_original>
// kernel: tpu_custom_call.1
$region0: #{tpu_custom_call.1}
  #allocation0 [shape = 'u32[]', space=smem, size = 0x4, offset = 0x4, fixed_abs, tag = 'smem constant byte address 0x4 - core index']
  #allocation1 [shape = 'u32[72,128]{1,0:T(1,128)}', space=vmem, size = 0x9000, scoped, tag = 'internal scratch']
  #allocation2 [shape = 'f32[128,128]{1,0:T(8,128)}', space=vmem, size = 0x10000, scoped, tag = 'scratch operand']
  %s0 = inlined_call_operand.vmem [shape: f32[128,128], index: 0, kind: input, shape index: {}]
  %s1 = inlined_call_operand.vmem [shape: f32[128,32], index: 1, kind: input, shape index: {}]
  %s2 = inlined_call_operand.vmem [shape: f32[32,128], index: 2, kind: input, shape index: {}]
  %s3 = inlined_call_operand.vmem [shape: f32[1,128], index: 3, kind: input, shape index: {}]
  %s4 = inlined_call_operand.hbm [shape: f32[128,128], index: 4, kind: output, shape index: {}]
  %s5 = sld [smem:[#allocation0]]
  $region34: #{tpu_custom_call.1} parent=0
    _
  %s7 = ssub.s32 1, %s5
  %s8 = scalar_select 0, %s7, %s5
  $region1: #{tpu_custom_call.1} parent=0
    #allocation3 [shape = 'u8[65536]{0}', space=vmem, size = 0x10000, scoped, tag = 'output window, operand 0, single buffered']
    #allocation4 [shape = 's32[1]{0}', space=sflag, size = 0x4, scoped, tag = 'scoped memory for tpu_custom_call.1']
    %9 = vsyncpa [#allocation4], 0
    // Predicated region
    $region2: #{tpu_custom_call.1} parent=1 // pred_check
      _
    $region3: #{tpu_custom_call.1} parent=1 // pred_check_branch
      %11 = sbr.rel (0) target = $region5
    $region4: #{tpu_custom_call.1} parent=1 // pred_region
      _
    $region5: #{tpu_custom_call.1} parent=1 // pred_fallthru
      _
    // Predicated region
    $region6: #{tpu_custom_call.1} parent=1 // pred_check
      _
    $region7: #{tpu_custom_call.1} parent=1 // pred_check_branch
      %13 = sbr.rel (0) target = $region9
    $region8: #{tpu_custom_call.1} parent=1 // pred_region
      _
    $region9: #{tpu_custom_call.1} parent=1 // pred_fallthru
      _
    // Predicated region
    $region10: #{tpu_custom_call.1} parent=1 // pred_check
      _
    $region11: #{tpu_custom_call.1} parent=1 // pred_check_branch
      %15 = sbr.rel (0) target = $region13
    $region12: #{tpu_custom_call.1} parent=1 // pred_region
      _
    $region13: #{tpu_custom_call.1} parent=1 // pred_fallthru
      _
    // Predicated region
    $region14: #{tpu_custom_call.1} parent=1 // pred_check
      _
    $region15: #{tpu_custom_call.1} parent=1 // pred_check_branch
      %17 = sbr.rel (0) target = $region17
    $region16: #{tpu_custom_call.1} parent=1 // pred_region
      _
    $region17: #{tpu_custom_call.1} parent=1 // pred_fallthru
      _
    %p18 = scmp.eq.s32.totalorder 0, 0
    // Predicated region
    $region18: #{tpu_custom_call.1} parent=1 // pred_check
      %p19 = pneg %p18
    $region19: #{tpu_custom_call.1} parent=1 // pred_check_branch
      %21 = sbr.rel (%p19) target = $region21
    $region20: #{tpu_custom_call.1} parent=1 // pred_region
      %22 = vst [vmem:[#allocation2] sm:$0xff] 0.0
      %23 = vst [vmem:[#allocation2 + $0x8] sm:$0xff] 0.0
      %24 = vst [vmem:[#allocation2 + $0x10] sm:$0xff] 0.0
      %25 = vst [vmem:[#allocation2 + $0x18] sm:$0xff] 0.0
      %26 = vst [vmem:[#allocation2 + $0x20] sm:$0xff] 0.0
      %27 = vst [vmem:[#allocation2 + $0x28] sm:$0xff] 0.0
      %28 = vst [vmem:[#allocation2 + $0x30] sm:$0xff] 0.0
      %29 = vst [vmem:[#allocation2 + $0x38] sm:$0xff] 0.0
      %30 = vst [vmem:[#allocation2 + $0x40] sm:$0xff] 0.0
      %31 = vst [vmem:[#allocation2 + $0x48] sm:$0xff] 0.0
      %32 = vst [vmem:[#allocation2 + $0x50] sm:$0xff] 0.0
      %33 = vst [vmem:[#allocation2 + $0x58] sm:$0xff] 0.0
      %34 = vst [vmem:[#allocation2 + $0x60] sm:$0xff] 0.0
      %35 = vst [vmem:[#allocation2 + $0x68] sm:$0xff] 0.0
      %36 = vst [vmem:[#allocation2 + $0x70] sm:$0xff] 0.0
      %37 = vst [vmem:[#allocation2 + $0x78] sm:$0xff] 0.0
    $region21: #{tpu_custom_call.1} parent=1 // pred_fallthru
      _
    %v38 = vld [vmem:[%s1] sm:$0xff]
    %v39 = vld [vmem:[%s1 + $0x8] sm:$0xff]
    %v40 = vld [vmem:[%s1 + $0x10] sm:$0xff]
    %v41 = vld [vmem:[%s1 + $0x18] sm:$0xff]
    %v42 = vld [vmem:[%s1 + $0x20] sm:$0xff]
    %v43 = vld [vmem:[%s1 + $0x28] sm:$0xff]
    %v44 = vld [vmem:[%s1 + $0x30] sm:$0xff]
    %v45 = vld [vmem:[%s1 + $0x38] sm:$0xff]
    %v46 = vld [vmem:[%s1 + $0x40] sm:$0xff]
    %v47 = vld [vmem:[%s1 + $0x48] sm:$0xff]
    %v48 = vld [vmem:[%s1 + $0x50] sm:$0xff]
    %v49 = vld [vmem:[%s1 + $0x58] sm:$0xff]
    %v50 = vld [vmem:[%s1 + $0x60] sm:$0xff]
    %v51 = vld [vmem:[%s1 + $0x68] sm:$0xff]
    %v52 = vld [vmem:[%s1 + $0x70] sm:$0xff]
    %v53 = vld [vmem:[%s1 + $0x78] sm:$0xff]
    %v54 = vld [vmem:[%s2] sm:$0xff]
    %v55 = vld [vmem:[%s2 + $0x8] sm:$0xff]
    %v56 = vld [vmem:[%s2 + $0x10] sm:$0xff]
    %v57 = vld [vmem:[%s2 + $0x18] sm:$0xff]
    %v58 = vld [vmem:[%s3] sm:$0x1]
    %v60 = vperm.slane %v58, 0
    %vm62 = vcmask 261120
    %v64 = vsel %vm62, %v38, 0
    %v67 = vsel %vm62, %v39, 0
    %v70 = vsel %vm62, %v40, 0
    %v73 = vsel %vm62, %v41, 0
    %v76 = vsel %vm62, %v42, 0
    %v79 = vsel %vm62, %v43, 0
    %v82 = vsel %vm62, %v44, 0
    %v85 = vsel %vm62, %v45, 0
    %v88 = vsel %vm62, %v46, 0
    %v91 = vsel %vm62, %v47, 0
    %v94 = vsel %vm62, %v48, 0
    %v97 = vsel %vm62, %v49, 0
    %v100 = vsel %vm62, %v50, 0
    %v103 = vsel %vm62, %v51, 0
    %v106 = vsel %vm62, %v52, 0
    %v109 = vsel %vm62, %v53, 0
    %111 = vmatpush.msra.mxu0 0.0
    %112 = vmatpush.msra.mxu0 0.0
    %113 = vmatpush.msra.mxu0 0.0
    %114 = vmatpush.msra.mxu0 0.0
    %115 = vmatpush.msra.mxu0 0.0
    %116 = vmatpush.msra.mxu0 0.0
    %117 = vmatpush.msra.mxu0 0.0
    %118 = vmatpush.msra.mxu0 0.0
    %119 = vmatpush.msra.mxu0 0.0
    %120 = vmatpush.msra.mxu0 0.0
    %121 = vmatpush.msra.mxu0 0.0
    %122 = vmatpush.msra.mxu0 0.0
    %123 = vmatpush.msra.mxu0 %v57
    %124 = vmatpush.msra.mxu0 %v56
    %125 = vmatpush.msra.mxu0 %v55
    %126 = vmatpush.msra.mxu0 %v54
    %127 = vmatmul.f32.gmra.mxu0 %v64
    %v128 = vpop.f32.mrf.mxu0
    %v129 = vadd.f32 %v60, %v128
    %130 = vmatmul.f32.gmra.mxu0 %v67
    %v131 = vpop.f32.mrf.mxu0
    %v132 = vadd.f32 %v60, %v131
    %133 = vmatmul.f32.gmra.mxu0 %v70
    %v134 = vpop.f32.mrf.mxu0
    %v135 = vadd.f32 %v60, %v134
    %136 = vmatmul.f32.gmra.mxu0 %v73
    %v137 = vpop.f32.mrf.mxu0
    %v138 = vadd.f32 %v60, %v137
    %139 = vmatmul.f32.gmra.mxu0 %v76
    %v140 = vpop.f32.mrf.mxu0
    %v141 = vadd.f32 %v60, %v140
    %142 = vmatmul.f32.gmra.mxu0 %v79
    %v143 = vpop.f32.mrf.mxu0
    %v144 = vadd.f32 %v60, %v143
    %145 = vmatmul.f32.gmra.mxu0 %v82
    %v146 = vpop.f32.mrf.mxu0
    %v147 = vadd.f32 %v60, %v146
    %148 = vmatmul.f32.gmra.mxu0 %v85
    %v149 = vpop.f32.mrf.mxu0
    %v150 = vadd.f32 %v60, %v149
    %151 = vmatmul.f32.gmra.mxu0 %v88
    %v152 = vpop.f32.mrf.mxu0
    %v153 = vadd.f32 %v60, %v152
    %154 = vmatmul.f32.gmra.mxu0 %v91
    %v155 = vpop.f32.mrf.mxu0
    %v156 = vadd.f32 %v60, %v155
    %157 = vmatmul.f32.gmra.mxu0 %v94
    %v158 = vpop.f32.mrf.mxu0
    %v159 = vadd.f32 %v60, %v158
    %160 = vmatmul.f32.gmra.mxu0 %v97
    %v161 = vpop.f32.mrf.mxu0
    %v162 = vadd.f32 %v60, %v161
    %163 = vmatmul.f32.gmra.mxu0 %v100
    %v164 = vpop.f32.mrf.mxu0
    %v165 = vadd.f32 %v60, %v164
    %166 = vmatmul.f32.gmra.mxu0 %v103
    %v167 = vpop.f32.mrf.mxu0
    %v168 = vadd.f32 %v60, %v167
    %169 = vmatmul.f32.gmra.mxu0 %v106
    %v170 = vpop.f32.mrf.mxu0
    %v171 = vadd.f32 %v60, %v170
    %172 = vmatmul.f32.gmra.mxu0 %v109
    %v173 = vpop.f32.mrf.mxu0
    %v174 = vadd.f32 %v60, %v173
    %175 = vdwg.mxu0
    %v176 = vld [vmem:[#allocation2] sm:$0xff]
    %v177 = vld [vmem:[#allocation2 + $0x8] sm:$0xff]
    %v178 = vld [vmem:[#allocation2 + $0x10] sm:$0xff]
    %v179 = vld [vmem:[#allocation2 + $0x18] sm:$0xff]
    %v180 = vld [vmem:[#allocation2 + $0x20] sm:$0xff]
    %v181 = vld [vmem:[#allocation2 + $0x28] sm:$0xff]
    %v182 = vld [vmem:[#allocation2 + $0x30] sm:$0xff]
    %v183 = vld [vmem:[#allocation2 + $0x38] sm:$0xff]
    %v184 = vld [vmem:[#allocation2 + $0x40] sm:$0xff]
    %v185 = vld [vmem:[#allocation2 + $0x48] sm:$0xff]
    %v186 = vld [vmem:[#allocation2 + $0x50] sm:$0xff]
    %v187 = vld [vmem:[#allocation2 + $0x58] sm:$0xff]
    %v188 = vld [vmem:[#allocation2 + $0x60] sm:$0xff]
    %v189 = vld [vmem:[#allocation2 + $0x68] sm:$0xff]
    %v190 = vld [vmem:[#allocation2 + $0x70] sm:$0xff]
    %v191 = vld [vmem:[#allocation2 + $0x78] sm:$0xff]
    %v192 = vld [vmem:[%s0] sm:$0xff]
    %v193 = vld [vmem:[%s0 + $0x8] sm:$0xff]
    %v194 = vld [vmem:[%s0 + $0x10] sm:$0xff]
    %v195 = vld [vmem:[%s0 + $0x18] sm:$0xff]
    %v196 = vld [vmem:[%s0 + $0x20] sm:$0xff]
    %v197 = vld [vmem:[%s0 + $0x28] sm:$0xff]
    %v198 = vld [vmem:[%s0 + $0x30] sm:$0xff]
    %v199 = vld [vmem:[%s0 + $0x38] sm:$0xff]
    %v200 = vld [vmem:[%s0 + $0x40] sm:$0xff]
    %v201 = vld [vmem:[%s0 + $0x48] sm:$0xff]
    %v202 = vld [vmem:[%s0 + $0x50] sm:$0xff]
    %v203 = vld [vmem:[%s0 + $0x58] sm:$0xff]
    %v204 = vld [vmem:[%s0 + $0x60] sm:$0xff]
    %v205 = vld [vmem:[%s0 + $0x68] sm:$0xff]
    %v206 = vld [vmem:[%s0 + $0x70] sm:$0xff]
    %v207 = vld [vmem:[%s0 + $0x78] sm:$0xff]
    %208 = vmatpush.msra.mxu0 %v174
    %209 = vmatpush.msra.mxu0 %v171
    %210 = vmatpush.msra.mxu0 %v168
    %211 = vmatpush.msra.mxu0 %v165
    %212 = vmatpush.msra.mxu0 %v162
    %213 = vmatpush.msra.mxu0 %v159
    %214 = vmatpush.msra.mxu0 %v156
    %215 = vmatpush.msra.mxu0 %v153
    %216 = vmatpush.msra.mxu0 %v150
    %217 = vmatpush.msra.mxu0 %v147
    %218 = vmatpush.msra.mxu0 %v144
    %219 = vmatpush.msra.mxu0 %v141
    %220 = vmatpush.msra.mxu0 %v138
    %221 = vmatpush.msra.mxu0 %v135
    %222 = vmatpush.msra.mxu0 %v132
    %223 = vmatpush.msra.mxu0 %v129
    %224 = vmatmul.f32.gmra.mxu0 %v192
    %v225 = vpop.f32.mrf.mxu0
    %v226 = vadd.f32 0.0, %v225
    %227 = vmatmul.f32.gmra.mxu0 %v193
    %v228 = vpop.f32.mrf.mxu0
    %v229 = vadd.f32 0.0, %v228
    %230 = vmatmul.f32.gmra.mxu0 %v194
    %v231 = vpop.f32.mrf.mxu0
    %v232 = vadd.f32 0.0, %v231
    %233 = vmatmul.f32.gmra.mxu0 %v195
    %v234 = vpop.f32.mrf.mxu0
    %v235 = vadd.f32 0.0, %v234
    %236 = vmatmul.f32.gmra.mxu0 %v196
    %v237 = vpop.f32.mrf.mxu0
    %v238 = vadd.f32 0.0, %v237
    %239 = vmatmul.f32.gmra.mxu0 %v197
    %v240 = vpop.f32.mrf.mxu0
    %v241 = vadd.f32 0.0, %v240
    %242 = vmatmul.f32.gmra.mxu0 %v198
    %v243 = vpop.f32.mrf.mxu0
    %v244 = vadd.f32 0.0, %v243
    %245 = vmatmul.f32.gmra.mxu0 %v199
    %v246 = vpop.f32.mrf.mxu0
    %v247 = vadd.f32 0.0, %v246
    %248 = vmatmul.f32.gmra.mxu0 %v200
    %v249 = vpop.f32.mrf.mxu0
    %v250 = vadd.f32 0.0, %v249
    %251 = vmatmul.f32.gmra.mxu0 %v201
    %v252 = vpop.f32.mrf.mxu0
    %v253 = vadd.f32 0.0, %v252
    %254 = vmatmul.f32.gmra.mxu0 %v202
    %v255 = vpop.f32.mrf.mxu0
    %v256 = vadd.f32 0.0, %v255
    %257 = vmatmul.f32.gmra.mxu0 %v203
    %v258 = vpop.f32.mrf.mxu0
    %v259 = vadd.f32 0.0, %v258
    %260 = vmatmul.f32.gmra.mxu0 %v204
    %v261 = vpop.f32.mrf.mxu0
    %v262 = vadd.f32 0.0, %v261
    %263 = vmatmul.f32.gmra.mxu0 %v205
    %v264 = vpop.f32.mrf.mxu0
    %v265 = vadd.f32 0.0, %v264
    %266 = vmatmul.f32.gmra.mxu0 %v206
    %v267 = vpop.f32.mrf.mxu0
    %v268 = vadd.f32 0.0, %v267
    %269 = vmatmul.f32.gmra.mxu0 %v207
    %v270 = vpop.f32.mrf.mxu0
    %v271 = vadd.f32 0.0, %v270
    %272 = vdwg.mxu0
    %v273 = vadd.f32 %v176, %v226
    %v274 = vadd.f32 %v177, %v229
    %v275 = vadd.f32 %v178, %v232
    %v276 = vadd.f32 %v179, %v235
    %v277 = vadd.f32 %v180, %v238
    %v278 = vadd.f32 %v181, %v241
    %v279 = vadd.f32 %v182, %v244
    %v280 = vadd.f32 %v183, %v247
    %v281 = vadd.f32 %v184, %v250
    %v282 = vadd.f32 %v185, %v253
    %v283 = vadd.f32 %v186, %v256
    %v284 = vadd.f32 %v187, %v259
    %v285 = vadd.f32 %v188, %v262
    %v286 = vadd.f32 %v189, %v265
    %v287 = vadd.f32 %v190, %v268
    %v288 = vadd.f32 %v191, %v271
    %289 = vst [vmem:[#allocation2] sm:$0xff] %v273
    %290 = vst [vmem:[#allocation2 + $0x8] sm:$0xff] %v274
    %291 = vst [vmem:[#allocation2 + $0x10] sm:$0xff] %v275
    %292 = vst [vmem:[#allocation2 + $0x18] sm:$0xff] %v276
    %293 = vst [vmem:[#allocation2 + $0x20] sm:$0xff] %v277
    %294 = vst [vmem:[#allocation2 + $0x28] sm:$0xff] %v278
    %295 = vst [vmem:[#allocation2 + $0x30] sm:$0xff] %v279
    %296 = vst [vmem:[#allocation2 + $0x38] sm:$0xff] %v280
    %297 = vst [vmem:[#allocation2 + $0x40] sm:$0xff] %v281
    %298 = vst [vmem:[#allocation2 + $0x48] sm:$0xff] %v282
    %299 = vst [vmem:[#allocation2 + $0x50] sm:$0xff] %v283
    %300 = vst [vmem:[#allocation2 + $0x58] sm:$0xff] %v284
    %301 = vst [vmem:[#allocation2 + $0x60] sm:$0xff] %v285
    %302 = vst [vmem:[#allocation2 + $0x68] sm:$0xff] %v286
    %303 = vst [vmem:[#allocation2 + $0x70] sm:$0xff] %v287
    %304 = vst [vmem:[#allocation2 + $0x78] sm:$0xff] %v288
    // Predicated region
    $region22: #{tpu_custom_call.1} parent=1 // pred_check
      %p305 = pneg %p18
    $region23: #{tpu_custom_call.1} parent=1 // pred_check_branch
      %307 = sbr.rel (%p305) target = $region25
    $region24: #{tpu_custom_call.1} parent=1 // pred_region
      %v308 = vld [vmem:[#allocation2] sm:$0xff]
      %v309 = vld [vmem:[#allocation2 + $0x8] sm:$0xff]
      %v310 = vld [vmem:[#allocation2 + $0x10] sm:$0xff]
      %v311 = vld [vmem:[#allocation2 + $0x18] sm:$0xff]
      %v312 = vld [vmem:[#allocation2 + $0x20] sm:$0xff]
      %v313 = vld [vmem:[#allocation2 + $0x28] sm:$0xff]
      %v314 = vld [vmem:[#allocation2 + $0x30] sm:$0xff]
      %v315 = vld [vmem:[#allocation2 + $0x38] sm:$0xff]
      %v316 = vld [vmem:[#allocation2 + $0x40] sm:$0xff]
      %v317 = vld [vmem:[#allocation2 + $0x48] sm:$0xff]
      %v318 = vld [vmem:[#allocation2 + $0x50] sm:$0xff]
      %v319 = vld [vmem:[#allocation2 + $0x58] sm:$0xff]
      %v320 = vld [vmem:[#allocation2 + $0x60] sm:$0xff]
      %v321 = vld [vmem:[#allocation2 + $0x68] sm:$0xff]
      %v322 = vld [vmem:[#allocation2 + $0x70] sm:$0xff]
      %v323 = vld [vmem:[#allocation2 + $0x78] sm:$0xff]
      %v324 = vtanh.pop %v308
      %v325 = vtanh.pop %v309
      %v326 = vtanh.pop %v310
      %v327 = vtanh.pop %v311
      %v328 = vtanh.pop %v312
      %v329 = vtanh.pop %v313
      %v330 = vtanh.pop %v314
      %v331 = vtanh.pop %v315
      %v332 = vtanh.pop %v316
      %v333 = vtanh.pop %v317
      %v334 = vtanh.pop %v318
      %v335 = vtanh.pop %v319
      %v336 = vtanh.pop %v320
      %v337 = vtanh.pop %v321
      %v338 = vtanh.pop %v322
      %v339 = vtanh.pop %v323
      %340 = vst [vmem:[#allocation3] sm:$0xff] %v324
      %341 = vst [vmem:[#allocation3 + $0x8] sm:$0xff] %v325
      %342 = vst [vmem:[#allocation3 + $0x10] sm:$0xff] %v326
      %343 = vst [vmem:[#allocation3 + $0x18] sm:$0xff] %v327
      %344 = vst [vmem:[#allocation3 + $0x20] sm:$0xff] %v328
      %345 = vst [vmem:[#allocation3 + $0x28] sm:$0xff] %v329
      %346 = vst [vmem:[#allocation3 + $0x30] sm:$0xff] %v330
      %347 = vst [vmem:[#allocation3 + $0x38] sm:$0xff] %v331
      %348 = vst [vmem:[#allocation3 + $0x40] sm:$0xff] %v332
      %349 = vst [vmem:[#allocation3 + $0x48] sm:$0xff] %v333
      %350 = vst [vmem:[#allocation3 + $0x50] sm:$0xff] %v334
      %351 = vst [vmem:[#allocation3 + $0x58] sm:$0xff] %v335
      %352 = vst [vmem:[#allocation3 + $0x60] sm:$0xff] %v336
      %353 = vst [vmem:[#allocation3 + $0x68] sm:$0xff] %v337
      %354 = vst [vmem:[#allocation3 + $0x70] sm:$0xff] %v338
      %355 = vst [vmem:[#allocation3 + $0x78] sm:$0xff] %v339
    $region25: #{tpu_custom_call.1} parent=1 // pred_fallthru
      _
    // Predicated region
    $region26: #{tpu_custom_call.1} parent=1 // pred_check
      _
    $region27: #{tpu_custom_call.1} parent=1 // pred_check_branch
      %357 = sbr.rel (0) target = $region29
    $region28: #{tpu_custom_call.1} parent=1 // pred_region
      %359 = vsyncadd [#allocation4], 0
      %s360 = sshll.u32 [#allocation3], 4
      %s361 = int_to_ptr.vmem [resolvable:$true] %s360
      %s362 = sshll.u32 %s4, 4
      %s363 = int_to_ptr.hbm [resolvable:$true] %s362
      %368 = dma.vmem_to_hbm [thread:$0]  %s361, 2048, %s363, [#allocation4], 128, 128, 8
    $region29: #{tpu_custom_call.1} parent=1 // pred_fallthru
      _
    // Predicated region
    $region30: #{tpu_custom_call.1} parent=1 // pred_check
      _
    $region31: #{tpu_custom_call.1} parent=1 // pred_check_branch
      %370 = sbr.rel (0) target = $region33
    $region32: #{tpu_custom_call.1} parent=1 // pred_region
      %372 = dma.done [#allocation4], 2048
    $region33: #{tpu_custom_call.1} parent=1 // pred_fallthru
      _
    %373 = vsyncpa [#allocation4], 1

</llo_original>
